<compile_context>
chip_gen: v6e
topology: v6e:2x2x1
jax: 0.10.0
libtpu: 0.0.40
codegen_flags: <defaults>
</compile_context>

<pallas_src>
import math

import jax
import jax.numpy as jnp
from jax import lax
from jax.experimental import pallas as pl
from jax.experimental.pallas import tpu as pltpu


def _attn_kernel(q_ref, k_ref, v_ref, m_ref, o_ref):
    scale = 1.0 / math.sqrt(q_ref.shape[-1])

    # Fold 1/sqrt(D) into Q: touches B*S*D elements instead of B*S*S logits.
    q = q_ref[...] * scale            # (B, S, D) f32
    k = k_ref[...]                    # (B, S, D)
    v = v_ref[...]                    # (B, S, D)
    m = m_ref[...]                    # (1, S, S) additive mask

    # 'bqd,bkd->bqk' on the MXU; contraction handled inside the MXU feed,
    # no explicit K transpose / vreg relayout.
    s = lax.dot_general(
        q, k,
        dimension_numbers=(((2,), (2,)), ((0,), (0,))),
        preferred_element_type=jnp.float32,
    ) + m                             # mask broadcasts over batch

    # Numerically stable softmax; normalization deferred past the PV matmul.
    s_max = jnp.max(s, axis=-1, keepdims=True)
    p = jnp.exp(s - s_max)
    denom = jnp.sum(p, axis=-1, keepdims=True)

    # 'bqk,bkd->bqd'
    o = lax.dot_general(
        p, v,
        dimension_numbers=(((2,), (1,)), ((0,), (0,))),
        preferred_element_type=jnp.float32,
    )
    # approx reciprocal -> EUP vrcp (separate VLIW slot, effectively free).
    o = o * pl.reciprocal(denom, approx=True)
    o_ref[...] = o.astype(o_ref.dtype)


def sdpa_pallas(Q, K, V, mask):
    B, S, D = Q.shape
    assert K.shape == (B, S, D) and V.shape == (B, S, D)
    assert mask.shape == (1, S, S)

    # Single grid step with whole-array blocks (the (8,128) rule is satisfied
    # via the "block == full array" exception). Total VMEM use here is ~1 MiB.
    # D=32 means the output uses 32/128 lanes; accepted because the kernel is
    # tiny — for larger shapes pack heads/batches into the lane axis.
    # NOTE(v7x): a single step uses one TensorCore; for larger B/S add a
    # 'parallel' batch / q-tile grid axis so both TCs get work.
    grid_spec = pltpu.PrefetchScalarGridSpec(
        num_scalar_prefetch=0,
        grid=(1,),
        in_specs=[
            pl.BlockSpec((B, S, D), lambda i: (0, 0, 0)),
            pl.BlockSpec((B, S, D), lambda i: (0, 0, 0)),
            pl.BlockSpec((B, S, D), lambda i: (0, 0, 0)),
            pl.BlockSpec((1, S, S), lambda i: (0, 0, 0)),
        ],
        out_specs=pl.BlockSpec((B, S, D), lambda i: (0, 0, 0)),
    )

    return pl.pallas_call(
        _attn_kernel,
        out_shape=jax.ShapeDtypeStruct((B, S, D), Q.dtype),
        grid_spec=grid_spec,
        compiler_params=pltpu.CompilerParams(
            dimension_semantics=("arbitrary",),
        ),
    )(Q, K, V, mask)


def sdpa_reference(Q, K, V, mask):
    d = Q.shape[-1]
    qk = jnp.einsum("bqd,bkd->bqk", Q, K) / math.sqrt(d)
    qk = qk + mask
    w = jax.nn.softmax(qk, axis=-1)
    return jnp.einsum("bqk,bkd->bqd", w, V)


if __name__ == "__main__":
    B, S, D = 2, 56, 32
    key = jax.random.PRNGKey(0)
    kq, kk, kv, km = jax.random.split(key, 4)

    Q = jax.random.normal(kq, (B, S, D), dtype=jnp.float32)
    K = jax.random.normal(kk, (B, S, D), dtype=jnp.float32)
    V = jax.random.normal(kv, (B, S, D), dtype=jnp.float32)
    # Deterministic additive mask (original module fills with -1e9); a random
    # keep/drop pattern exercises the masked-softmax path.
    mask = jnp.where(
        jax.random.uniform(km, (1, S, S)) > 0.7,
        jnp.float32(-1e9),
        jnp.float32(0.0),
    )

    out = sdpa_pallas(Q, K, V, mask)
    jax.block_until_ready(out)

    ref = sdpa_reference(Q, K, V, mask)
    # Slightly relaxed tolerance: approx (EUP) reciprocal differs from exact
    # division at the ~1e-3 level.
    assert jnp.allclose(out, ref, atol=2e-3, rtol=2e-3), "mismatch vs reference"

    print("KERNEL_OK")
</pallas_src>

<mosaic_0001>
module attributes {stable_mosaic.version = 11 : i64} {
  func.func @_attn_kernel(%arg0: i32, %arg1: memref<2x56x32xf32, #tpu.memory_space<vmem>>, %arg2: memref<2x56x32xf32, #tpu.memory_space<vmem>>, %arg3: memref<2x56x32xf32, #tpu.memory_space<vmem>>, %arg4: memref<1x56x56xf32, #tpu.memory_space<vmem>>, %arg5: memref<2x56x32xf32, #tpu.memory_space<vmem>>) attributes {dimension_semantics = [#tpu.dimension_semantics<arbitrary>], iteration_bounds = array<i64: 1>, scalar_prefetch = 0 : i64, scratch_operands = 0 : i64, tpu.core_type = #tpu.core_type<tc>, window_params = [{pipeline_mode = #tpu.pipeline_mode<synchronous>, transform_indices = @transform_0, window_bounds = array<i64: 2, 56, 32>}, {pipeline_mode = #tpu.pipeline_mode<synchronous>, transform_indices = @transform_1, window_bounds = array<i64: 2, 56, 32>}, {pipeline_mode = #tpu.pipeline_mode<synchronous>, transform_indices = @transform_2, window_bounds = array<i64: 2, 56, 32>}, {pipeline_mode = #tpu.pipeline_mode<synchronous>, transform_indices = @transform_3, window_bounds = array<i64: 1, 56, 56>}, {pipeline_mode = #tpu.pipeline_mode<synchronous>, transform_indices = @transform_4, window_bounds = array<i64: 2, 56, 32>}]} {
    %c0 = arith.constant 0 : index
    %c0_0 = arith.constant 0 : index
    %c0_1 = arith.constant 0 : index
    %0 = vector.load %arg1[%c0, %c0_0, %c0_1] : memref<2x56x32xf32, #tpu.memory_space<vmem>>, vector<2x56x32xf32>
    %cst = arith.constant 0.176776692 : f32
    %1 = vector.broadcast %cst : f32 to vector<2x56x32xf32>
    %2 = arith.mulf %0, %1 : vector<2x56x32xf32>
    %c0_2 = arith.constant 0 : index
    %c0_3 = arith.constant 0 : index
    %c0_4 = arith.constant 0 : index
    %3 = vector.load %arg2[%c0_2, %c0_3, %c0_4] : memref<2x56x32xf32, #tpu.memory_space<vmem>>, vector<2x56x32xf32>
    %c0_5 = arith.constant 0 : index
    %c0_6 = arith.constant 0 : index
    %c0_7 = arith.constant 0 : index
    %4 = vector.load %arg3[%c0_5, %c0_6, %c0_7] : memref<2x56x32xf32, #tpu.memory_space<vmem>>, vector<2x56x32xf32>
    %c0_8 = arith.constant 0 : index
    %c0_9 = arith.constant 0 : index
    %c0_10 = arith.constant 0 : index
    %5 = vector.load %arg4[%c0_8, %c0_9, %c0_10] : memref<1x56x56xf32, #tpu.memory_space<vmem>>, vector<1x56x56xf32>
    %cst_11 = arith.constant dense<0.000000e+00> : vector<2x56x56xf32>
    %6 = tpu.matmul %2, %3, %cst_11 {dimension_numbers = #tpu.dot_dimension_numbers<[2], [2], [1], [1], [0, 0, 0, 1, 1, 1], [0], [0]>} : vector<2x56x32xf32>, vector<2x56x32xf32>, vector<2x56x56xf32> -> vector<2x56x56xf32>
    %7 = vector.broadcast %5 : vector<1x56x56xf32> to vector<2x56x56xf32>
    %8 = arith.addf %6, %7 : vector<2x56x56xf32>
    %cst_12 = arith.constant dense<0xFF800000> : vector<2x56xf32>
    %9 = vector.multi_reduction <maximumf>, %8, %cst_12 [2] : vector<2x56x56xf32> to vector<2x56xf32>
    %10 = vector.shape_cast %9 : vector<2x56xf32> to vector<2x56x1xf32>
    %11 = vector.broadcast %10 : vector<2x56x1xf32> to vector<2x56x56xf32>
    %12 = arith.subf %8, %11 : vector<2x56x56xf32>
    %13 = math.exp %12 : vector<2x56x56xf32>
    %cst_13 = arith.constant dense<0.000000e+00> : vector<2x56xf32>
    %14 = vector.multi_reduction <add>, %13, %cst_13 [2] : vector<2x56x56xf32> to vector<2x56xf32>
    %15 = vector.shape_cast %14 : vector<2x56xf32> to vector<2x56x1xf32>
    %cst_14 = arith.constant dense<0.000000e+00> : vector<2x56x32xf32>
    %16 = tpu.matmul %13, %4, %cst_14 {dimension_numbers = #tpu.dot_dimension_numbers<[2], [1], [1], [2], [0, 0, 0, 1, 1, 2], [0], [0]>} : vector<2x56x56xf32>, vector<2x56x32xf32>, vector<2x56x32xf32> -> vector<2x56x32xf32>
    %17 = tpu.reciprocal %15 {approx = true} : vector<2x56x1xf32> -> vector<2x56x1xf32>
    %18 = vector.broadcast %17 : vector<2x56x1xf32> to vector<2x56x32xf32>
    %19 = arith.mulf %16, %18 : vector<2x56x32xf32>
    %c0_15 = arith.constant 0 : index
    %c0_16 = arith.constant 0 : index
    %c0_17 = arith.constant 0 : index
    %20 = vector.load %arg5[%c0_15, %c0_16, %c0_17] : memref<2x56x32xf32, #tpu.memory_space<vmem>>, vector<2x56x32xf32>
    tpu.vector_store %arg5[%c0_15, %c0_16, %c0_17], %19 {strides = array<i32>} : memref<2x56x32xf32, #tpu.memory_space<vmem>>, vector<2x56x32xf32>,
    return
  }
  func.func @transform_0(%arg0: i32) -> (i32, i32, i32) {
    %c0_i32 = arith.constant 0 : i32
    %c0_i32_0 = arith.constant 0 : i32
    %c0_i32_1 = arith.constant 0 : i32
    %c0_i32_2 = arith.constant 0 : i32
    return %c0_i32, %c0_i32_0, %c0_i32_1 : i32, i32, i32
  }
  func.func @transform_1(%arg0: i32) -> (i32, i32, i32) {
    %c0_i32 = arith.constant 0 : i32
    %c0_i32_0 = arith.constant 0 : i32
    %c0_i32_1 = arith.constant 0 : i32
    %c0_i32_2 = arith.constant 0 : i32
    return %c0_i32, %c0_i32_0, %c0_i32_1 : i32, i32, i32
  }
  func.func @transform_2(%arg0: i32) -> (i32, i32, i32) {
    %c0_i32 = arith.constant 0 : i32
    %c0_i32_0 = arith.constant 0 : i32
    %c0_i32_1 = arith.constant 0 : i32
    %c0_i32_2 = arith.constant 0 : i32
    return %c0_i32, %c0_i32_0, %c0_i32_1 : i32, i32, i32
  }
  func.func @transform_3(%arg0: i32) -> (i32, i32, i32) {
    %c0_i32 = arith.constant 0 : i32
    %c0_i32_0 = arith.constant 0 : i32
    %c0_i32_1 = arith.constant 0 : i32
    %c0_i32_2 = arith.constant 0 : i32
    return %c0_i32, %c0_i32_0, %c0_i32_1 : i32, i32, i32
  }
  func.func @transform_4(%arg0: i32) -> (i32, i32, i32) {
    %c0_i32 = arith.constant 0 : i32
    %c0_i32_0 = arith.constant 0 : i32
    %c0_i32_1 = arith.constant 0 : i32
    %c0_i32_2 = arith.constant 0 : i32
    return %c0_i32, %c0_i32_0, %c0_i32_1 : i32, i32, i32
  }
}

</mosaic_0001>

<llo_original>
// kernel: tpu_custom_call.1
$region0: #{tpu_custom_call.1}
  #allocation0 [shape = 'u32[]', space=smem, size = 0x4, offset = 0x4, fixed_abs, tag = 'smem constant byte address 0x4 - core index']
  #allocation1 [shape = 'u32[144,128]{1,0:T(1,128)}', space=vmem, size = 0x12000, scoped, tag = 'internal scratch']
  %s0 = inlined_call_operand.vmem [shape: f32[2,56,32], index: 0, kind: input, shape index: {}]
  %s1 = inlined_call_operand.vmem [shape: f32[2,56,32], index: 1, kind: input, shape index: {}]
  %s2 = inlined_call_operand.vmem [shape: f32[2,56,32], index: 2, kind: input, shape index: {}]
  %s3 = inlined_call_operand.vmem [shape: f32[1,56,56], index: 3, kind: input, shape index: {}]
  %s4 = inlined_call_operand.vmem [shape: f32[2,56,32], index: 4, kind: output, shape index: {}]
  %s5 = sld [smem:[#allocation0]]
  $region26: #{tpu_custom_call.1} parent=0
    _
  %s7 = ssub.s32 1, %s5
  %s8 = scalar_select 0, %s7, %s5
  // Predicated region
  $region2: #{tpu_custom_call.1} parent=0 // pred_check
    _
  $region3: #{tpu_custom_call.1} parent=0 // pred_check_branch
    %10 = sbr.rel (0) target = $region5
  $region4: #{tpu_custom_call.1} parent=0 // pred_region
    _
  $region5: #{tpu_custom_call.1} parent=0 // pred_fallthru
    _
  // Predicated region
  $region6: #{tpu_custom_call.1} parent=0 // pred_check
    _
  $region7: #{tpu_custom_call.1} parent=0 // pred_check_branch
    %12 = sbr.rel (0) target = $region9
  $region8: #{tpu_custom_call.1} parent=0 // pred_region
    _
  $region9: #{tpu_custom_call.1} parent=0 // pred_fallthru
    _
  // Predicated region
  $region10: #{tpu_custom_call.1} parent=0 // pred_check
    _
  $region11: #{tpu_custom_call.1} parent=0 // pred_check_branch
    %14 = sbr.rel (0) target = $region13
  $region12: #{tpu_custom_call.1} parent=0 // pred_region
    _
  $region13: #{tpu_custom_call.1} parent=0 // pred_fallthru
    _
  // Predicated region
  $region14: #{tpu_custom_call.1} parent=0 // pred_check
    _
  $region15: #{tpu_custom_call.1} parent=0 // pred_check_branch
    %16 = sbr.rel (0) target = $region17
  $region16: #{tpu_custom_call.1} parent=0 // pred_region
    _
  $region17: #{tpu_custom_call.1} parent=0 // pred_fallthru
    _
  %v17 = vld [vmem:[%s0] sm:$0xff]
  %v18 = vld [vmem:[%s0 + $0x8] sm:$0xff]
  %v19 = vld [vmem:[%s0 + $0x10] sm:$0xff]
  %v20 = vld [vmem:[%s0 + $0x18] sm:$0xff]
  %v21 = vld [vmem:[%s0 + $0x20] sm:$0xff]
  %v22 = vld [vmem:[%s0 + $0x28] sm:$0xff]
  %v23 = vld [vmem:[%s0 + $0x30] sm:$0xff]
  %v24 = vld [vmem:[%s0 + $0x38] sm:$0xff]
  %v25 = vld [vmem:[%s0 + $0x40] sm:$0xff]
  %v26 = vld [vmem:[%s0 + $0x48] sm:$0xff]
  %v27 = vld [vmem:[%s0 + $0x50] sm:$0xff]
  %v28 = vld [vmem:[%s0 + $0x58] sm:$0xff]
  %v29 = vld [vmem:[%s0 + $0x60] sm:$0xff]
  %v30 = vld [vmem:[%s0 + $0x68] sm:$0xff]
  %v31 = vmul.f32 %v17, 0.17677669
  %v32 = vmul.f32 %v18, 0.17677669
  %v33 = vmul.f32 %v19, 0.17677669
  %v34 = vmul.f32 %v20, 0.17677669
  %v35 = vmul.f32 %v21, 0.17677669
  %v36 = vmul.f32 %v22, 0.17677669
  %v37 = vmul.f32 %v23, 0.17677669
  %v38 = vmul.f32 %v24, 0.17677669
  %v39 = vmul.f32 %v25, 0.17677669
  %v40 = vmul.f32 %v26, 0.17677669
  %v41 = vmul.f32 %v27, 0.17677669
  %v42 = vmul.f32 %v28, 0.17677669
  %v43 = vmul.f32 %v29, 0.17677669
  %v44 = vmul.f32 %v30, 0.17677669
  %v45 = vld [vmem:[%s1] sm:$0xff]
  %v46 = vld [vmem:[%s1 + $0x8] sm:$0xff]
  %v47 = vld [vmem:[%s1 + $0x10] sm:$0xff]
  %v48 = vld [vmem:[%s1 + $0x18] sm:$0xff]
  %v49 = vld [vmem:[%s1 + $0x20] sm:$0xff]
  %v50 = vld [vmem:[%s1 + $0x28] sm:$0xff]
  %v51 = vld [vmem:[%s1 + $0x30] sm:$0xff]
  %v52 = vld [vmem:[%s1 + $0x38] sm:$0xff]
  %v53 = vld [vmem:[%s1 + $0x40] sm:$0xff]
  %v54 = vld [vmem:[%s1 + $0x48] sm:$0xff]
  %v55 = vld [vmem:[%s1 + $0x50] sm:$0xff]
  %v56 = vld [vmem:[%s1 + $0x58] sm:$0xff]
  %v57 = vld [vmem:[%s1 + $0x60] sm:$0xff]
  %v58 = vld [vmem:[%s1 + $0x68] sm:$0xff]
  %v59 = vld [vmem:[%s2] sm:$0xff]
  %v60 = vld [vmem:[%s2 + $0x8] sm:$0xff]
  %v61 = vld [vmem:[%s2 + $0x10] sm:$0xff]
  %v62 = vld [vmem:[%s2 + $0x18] sm:$0xff]
  %v63 = vld [vmem:[%s2 + $0x20] sm:$0xff]
  %v64 = vld [vmem:[%s2 + $0x28] sm:$0xff]
  %v65 = vld [vmem:[%s2 + $0x30] sm:$0xff]
  %v66 = vld [vmem:[%s2 + $0x38] sm:$0xff]
  %v67 = vld [vmem:[%s2 + $0x40] sm:$0xff]
  %v68 = vld [vmem:[%s2 + $0x48] sm:$0xff]
  %v69 = vld [vmem:[%s2 + $0x50] sm:$0xff]
  %v70 = vld [vmem:[%s2 + $0x58] sm:$0xff]
  %v71 = vld [vmem:[%s2 + $0x60] sm:$0xff]
  %v72 = vld [vmem:[%s2 + $0x68] sm:$0xff]
  %v73 = vld [vmem:[%s3] sm:$0xff]
  %v74 = vld [vmem:[%s3 + $0x8] sm:$0xff]
  %v75 = vld [vmem:[%s3 + $0x10] sm:$0xff]
  %v76 = vld [vmem:[%s3 + $0x18] sm:$0xff]
  %v77 = vld [vmem:[%s3 + $0x20] sm:$0xff]
  %v78 = vld [vmem:[%s3 + $0x28] sm:$0xff]
  %v79 = vld [vmem:[%s3 + $0x30] sm:$0xff]
  %vm80 = vcmask 261120
  %v82 = vsel %vm80, %v31, 0
  %v85 = vsel %vm80, %v32, 0
  %v88 = vsel %vm80, %v33, 0
  %v91 = vsel %vm80, %v34, 0
  %v94 = vsel %vm80, %v35, 0
  %v97 = vsel %vm80, %v36, 0
  %v100 = vsel %vm80, %v37, 0
  %v103 = vsel %vm80, %v45, 0
  %v106 = vsel %vm80, %v46, 0
  %v109 = vsel %vm80, %v47, 0
  %v112 = vsel %vm80, %v48, 0
  %v115 = vsel %vm80, %v49, 0
  %v118 = vsel %vm80, %v50, 0
  %v121 = vsel %vm80, %v51, 0
  %123 = vmatprep.subr.mxu0 0.0
  %124 = vmatpush1.xpose.msra.mxu0 0.0
  %125 = vmatprep.subr.mxu0 0.0
  %126 = vmatpush1.xpose.msra.mxu0 0.0
  %127 = vmatprep.subr.mxu0 0.0
  %128 = vmatpush1.xpose.msra.mxu0 0.0
  %129 = vmatprep.subr.mxu0 0.0
  %130 = vmatpush1.xpose.msra.mxu0 0.0
  %131 = vmatprep.subr.mxu0 0.0
  %132 = vmatpush1.xpose.msra.mxu0 0.0
  %133 = vmatprep.subr.mxu0 0.0
  %134 = vmatpush1.xpose.msra.mxu0 0.0
  %135 = vmatprep.subr.mxu0 0.0
  %136 = vmatpush1.xpose.msra.mxu0 0.0
  %137 = vmatprep.subr.mxu0 0.0
  %138 = vmatpush1.xpose.msra.mxu0 0.0
  %139 = vmatprep.subr.mxu0 0.0
  %140 = vmatpush1.xpose.msra.mxu0 0.0
  %141 = vmatprep.subr.mxu0 0.0
  %142 = vmatpush1.xpose.msra.mxu0 %v121
  %143 = vmatprep.subr.mxu0 0.0
  %144 = vmatpush1.xpose.msra.mxu0 %v118
  %145 = vmatprep.subr.mxu0 0.0
  %146 = vmatpush1.xpose.msra.mxu0 %v115
  %147 = vmatprep.subr.mxu0 0.0
  %148 = vmatpush1.xpose.msra.mxu0 %v112
  %149 = vmatprep.subr.mxu0 0.0
  %150 = vmatpush1.xpose.msra.mxu0 %v109
  %151 = vmatprep.subr.mxu0 0.0
  %152 = vmatpush1.xpose.msra.mxu0 %v106
  %153 = vmatprep.subr.mxu0 0.0
  %154 = vmatpush1.xpose.msra.mxu0 %v103
  %155 = vmatprep.subr.mxu0 0.0
  %156 = vmatpush2.xpose.msra.mxu0 0.0
  %157 = vmatprep.subr.mxu0 0.0
  %158 = vmatpush2.xpose.msra.mxu0 0.0
  %159 = vmatprep.subr.mxu0 0.0
  %160 = vmatpush2.xpose.msra.mxu0 0.0
  %161 = vmatprep.subr.mxu0 0.0
  %162 = vmatpush2.xpose.msra.mxu0 0.0
  %163 = vmatprep.subr.mxu0 0.0
  %164 = vmatpush2.xpose.msra.mxu0 0.0
  %165 = vmatprep.subr.mxu0 0.0
  %166 = vmatpush2.xpose.msra.mxu0 0.0
  %167 = vmatprep.subr.mxu0 0.0
  %168 = vmatpush2.xpose.msra.mxu0 0.0
  %169 = vmatprep.subr.mxu0 0.0
  %170 = vmatpush2.xpose.msra.mxu0 0.0
  %171 = vmatprep.subr.mxu0 0.0
  %172 = vmatpush2.xpose.msra.mxu0 0.0
  %173 = vmatprep.subr.mxu0 0.0
  %174 = vmatpush2.xpose.msra.mxu0 0.0
  %175 = vmatprep.subr.mxu0 0.0
  %176 = vmatpush2.xpose.msra.mxu0 0.0
  %177 = vmatprep.subr.mxu0 0.0
  %178 = vmatpush2.xpose.msra.mxu0 0.0
  %179 = vmatprep.subr.mxu0 0.0
  %180 = vmatpush2.xpose.msra.mxu0 0.0
  %181 = vmatprep.subr.mxu0 0.0
  %182 = vmatpush2.xpose.msra.mxu0 0.0
  %183 = vmatprep.subr.mxu0 0.0
  %184 = vmatpush2.xpose.msra.mxu0 0.0
  %185 = vmatprep.subr.mxu0 0.0
  %186 = vmatpush2.xpose.msra.mxu0 0.0
  %187 = vmatprep.mubr.f32.mxu0 0.0
  %188 = vmatmul.mubr.f32.gmra.mxu0 %v82
  %v189 = vpop.f32.mrf.mxu0
  %v190 = vadd.f32 %v73, %v189
  %v191 = vpop.f32.mrf.mxu0
  %192 = vmatprep.mubr.f32.mxu0 0.0
  %193 = vmatmul.mubr.f32.gmra.mxu0 %v85
  %v194 = vpop.f32.mrf.mxu0
  %v195 = vadd.f32 %v74, %v194
  %v196 = vpop.f32.mrf.mxu0
  %197 = vmatprep.mubr.f32.mxu0 0.0
  %198 = vmatmul.mubr.f32.gmra.mxu0 %v88
  %v199 = vpop.f32.mrf.mxu0
  %v200 = vadd.f32 %v75, %v199
  %v201 = vpop.f32.mrf.mxu0
  %202 = vmatprep.mubr.f32.mxu0 0.0
  %203 = vmatmul.mubr.f32.gmra.mxu0 %v91
  %v204 = vpop.f32.mrf.mxu0
  %v205 = vadd.f32 %v76, %v204
  %v206 = vpop.f32.mrf.mxu0
  %207 = vmatprep.mubr.f32.mxu0 0.0
  %208 = vmatmul.mubr.f32.gmra.mxu0 %v94
  %v209 = vpop.f32.mrf.mxu0
  %v210 = vadd.f32 %v77, %v209
  %v211 = vpop.f32.mrf.mxu0
  %212 = vmatprep.mubr.f32.mxu0 0.0
  %213 = vmatmul.mubr.f32.gmra.mxu0 %v97
  %v214 = vpop.f32.mrf.mxu0
  %v215 = vadd.f32 %v78, %v214
  %v216 = vpop.f32.mrf.mxu0
  %217 = vmatprep.mubr.f32.mxu0 0.0
  %218 = vmatmul.mubr.f32.gmra.mxu0 %v100
  %v219 = vpop.f32.mrf.mxu0
  %v220 = vadd.f32 %v79, %v219
  %v221 = vpop.f32.mrf.mxu0
  %222 = vdwg.mxu0
  %v224 = vsel %vm80, %v38, 0
  %v227 = vsel %vm80, %v39, 0
  %v230 = vsel %vm80, %v40, 0
  %v233 = vsel %vm80, %v41, 0
  %v236 = vsel %vm80, %v42, 0
  %v239 = vsel %vm80, %v43, 0
  %v242 = vsel %vm80, %v44, 0
  %v245 = vsel %vm80, %v52, 0
  %v248 = vsel %vm80, %v53, 0
  %v251 = vsel %vm80, %v54, 0
  %v254 = vsel %vm80, %v55, 0
  %v257 = vsel %vm80, %v56, 0
  %v260 = vsel %vm80, %v57, 0
  %v263 = vsel %vm80, %v58, 0
  %265 = vmatprep.subr.mxu0 0.0
  %266 = vmatpush1.xpose.msra.mxu0 0.0
  %267 = vmatprep.subr.mxu0 0.0
  %268 = vmatpush1.xpose.msra.mxu0 0.0
  %269 = vmatprep.subr.mxu0 0.0
  %270 = vmatpush1.xpose.msra.mxu0 0.0
  %271 = vmatprep.subr.mxu0 0.0
  %272 = vmatpush1.xpose.msra.mxu0 0.0
  %273 = vmatprep.subr.mxu0 0.0
  %274 = vmatpush1.xpose.msra.mxu0 0.0
  %275 = vmatprep.subr.mxu0 0.0
  %276 = vmatpush1.xpose.msra.mxu0 0.0
  %277 = vmatprep.subr.mxu0 0.0
  %278 = vmatpush1.xpose.msra.mxu0 0.0
  %279 = vmatprep.subr.mxu0 0.0
  %280 = vmatpush1.xpose.msra.mxu0 0.0
  %281 = vmatprep.subr.mxu0 0.0
  %282 = vmatpush1.xpose.msra.mxu0 0.0
  %283 = vmatprep.subr.mxu0 0.0
  %284 = vmatpush1.xpose.msra.mxu0 %v263
  %285 = vmatprep.subr.mxu0 0.0
  %286 = vmatpush1.xpose.msra.mxu0 %v260
  %287 = vmatprep.subr.mxu0 0.0
  %288 = vmatpush1.xpose.msra.mxu0 %v257
  %289 = vmatprep.subr.mxu0 0.0
  %290 = vmatpush1.xpose.msra.mxu0 %v254
  %291 = vmatprep.subr.mxu0 0.0
  %292 = vmatpush1.xpose.msra.mxu0 %v251
  %293 = vmatprep.subr.mxu0 0.0
  %294 = vmatpush1.xpose.msra.mxu0 %v248
  %295 = vmatprep.subr.mxu0 0.0
  %296 = vmatpush1.xpose.msra.mxu0 %v245
  %297 = vmatprep.subr.mxu0 0.0
  %298 = vmatpush2.xpose.msra.mxu0 0.0
  %299 = vmatprep.subr.mxu0 0.0
  %300 = vmatpush2.xpose.msra.mxu0 0.0
  %301 = vmatprep.subr.mxu0 0.0
  %302 = vmatpush2.xpose.msra.mxu0 0.0
  %303 = vmatprep.subr.mxu0 0.0
  %304 = vmatpush2.xpose.msra.mxu0 0.0
  %305 = vmatprep.subr.mxu0 0.0
  %306 = vmatpush2.xpose.msra.mxu0 0.0
  %307 = vmatprep.subr.mxu0 0.0
  %308 = vmatpush2.xpose.msra.mxu0 0.0
  %309 = vmatprep.subr.mxu0 0.0
  %310 = vmatpush2.xpose.msra.mxu0 0.0
  %311 = vmatprep.subr.mxu0 0.0
  %312 = vmatpush2.xpose.msra.mxu0 0.0
  %313 = vmatprep.subr.mxu0 0.0
  %314 = vmatpush2.xpose.msra.mxu0 0.0
  %315 = vmatprep.subr.mxu0 0.0
  %316 = vmatpush2.xpose.msra.mxu0 0.0
  %317 = vmatprep.subr.mxu0 0.0
  %318 = vmatpush2.xpose.msra.mxu0 0.0
  %319 = vmatprep.subr.mxu0 0.0
  %320 = vmatpush2.xpose.msra.mxu0 0.0
  %321 = vmatprep.subr.mxu0 0.0
  %322 = vmatpush2.xpose.msra.mxu0 0.0
  %323 = vmatprep.subr.mxu0 0.0
  %324 = vmatpush2.xpose.msra.mxu0 0.0
  %325 = vmatprep.subr.mxu0 0.0
  %326 = vmatpush2.xpose.msra.mxu0 0.0
  %327 = vmatprep.subr.mxu0 0.0
  %328 = vmatpush2.xpose.msra.mxu0 0.0
  %329 = vmatprep.mubr.f32.mxu0 0.0
  %330 = vmatmul.mubr.f32.gmra.mxu0 %v224
  %v331 = vpop.f32.mrf.mxu0
  %v332 = vadd.f32 %v73, %v331
  %v333 = vpop.f32.mrf.mxu0
  %334 = vmatprep.mubr.f32.mxu0 0.0
  %335 = vmatmul.mubr.f32.gmra.mxu0 %v227
  %v336 = vpop.f32.mrf.mxu0
  %v337 = vadd.f32 %v74, %v336
  %v338 = vpop.f32.mrf.mxu0
  %339 = vmatprep.mubr.f32.mxu0 0.0
  %340 = vmatmul.mubr.f32.gmra.mxu0 %v230
  %v341 = vpop.f32.mrf.mxu0
  %v342 = vadd.f32 %v75, %v341
  %v343 = vpop.f32.mrf.mxu0
  %344 = vmatprep.mubr.f32.mxu0 0.0
  %345 = vmatmul.mubr.f32.gmra.mxu0 %v233
  %v346 = vpop.f32.mrf.mxu0
  %v347 = vadd.f32 %v76, %v346
  %v348 = vpop.f32.mrf.mxu0
  %349 = vmatprep.mubr.f32.mxu0 0.0
  %350 = vmatmul.mubr.f32.gmra.mxu0 %v236
  %v351 = vpop.f32.mrf.mxu0
  %v352 = vadd.f32 %v77, %v351
  %v353 = vpop.f32.mrf.mxu0
  %354 = vmatprep.mubr.f32.mxu0 0.0
  %355 = vmatmul.mubr.f32.gmra.mxu0 %v239
  %v356 = vpop.f32.mrf.mxu0
  %v357 = vadd.f32 %v78, %v356
  %v358 = vpop.f32.mrf.mxu0
  %359 = vmatprep.mubr.f32.mxu0 0.0
  %360 = vmatmul.mubr.f32.gmra.mxu0 %v242
  %v361 = vpop.f32.mrf.mxu0
  %v362 = vadd.f32 %v79, %v361
  %v363 = vpop.f32.mrf.mxu0
  %364 = vdwg.mxu0
  %vm365 = vcmask 457728
  %v366 = vsel %vm365, %v190, -inf
  %367 = vmax.xlane.f32.xlu0 %v366
  %v368 = vpop.xlane.xlu0 %367
  %v369 = vsel %vm365, %v195, -inf
  %370 = vmax.xlane.f32.xlu0 %v369
  %v371 = vpop.xlane.xlu0 %370
  %v372 = vsel %vm365, %v200, -inf
  %373 = vmax.xlane.f32.xlu0 %v372
  %v374 = vpop.xlane.xlu0 %373
  %v375 = vsel %vm365, %v205, -inf
  %376 = vmax.xlane.f32.xlu0 %v375
  %v377 = vpop.xlane.xlu0 %376
  %v378 = vsel %vm365, %v210, -inf
  %379 = vmax.xlane.f32.xlu0 %v378
  %v380 = vpop.xlane.xlu0 %379
  %v381 = vsel %vm365, %v215, -inf
  %382 = vmax.xlane.f32.xlu0 %v381
  %v383 = vpop.xlane.xlu0 %382
  %v384 = vsel %vm365, %v220, -inf
  %385 = vmax.xlane.f32.xlu0 %v384
  %v386 = vpop.xlane.xlu0 %385
  %v387 = vsel %vm365, %v332, -inf
  %388 = vmax.xlane.f32.xlu0 %v387
  %v389 = vpop.xlane.xlu0 %388
  %v390 = vsel %vm365, %v337, -inf
  %391 = vmax.xlane.f32.xlu0 %v390
  %v392 = vpop.xlane.xlu0 %391
  %v393 = vsel %vm365, %v342, -inf
  %394 = vmax.xlane.f32.xlu0 %v393
  %v395 = vpop.xlane.xlu0 %394
  %v396 = vsel %vm365, %v347, -inf
  %397 = vmax.xlane.f32.xlu0 %v396
  %v398 = vpop.xlane.xlu0 %397
  %v399 = vsel %vm365, %v352, -inf
  %400 = vmax.xlane.f32.xlu0 %v399
  %v401 = vpop.xlane.xlu0 %400
  %v402 = vsel %vm365, %v357, -inf
  %403 = vmax.xlane.f32.xlu0 %v402
  %v404 = vpop.xlane.xlu0 %403
  %v405 = vsel %vm365, %v362, -inf
  %406 = vmax.xlane.f32.xlu0 %v405
  %v407 = vpop.xlane.xlu0 %406
  %v408 = vsub.f32 %v190, %v368
  %v409 = vsub.f32 %v195, %v371
  %v410 = vsub.f32 %v200, %v374
  %v411 = vsub.f32 %v205, %v377
  %v412 = vsub.f32 %v210, %v380
  %v413 = vsub.f32 %v215, %v383
  %v414 = vsub.f32 %v220, %v386
  %v415 = vsub.f32 %v332, %v389
  %v416 = vsub.f32 %v337, %v392
  %v417 = vsub.f32 %v342, %v395
  %v418 = vsub.f32 %v347, %v398
  %v419 = vsub.f32 %v352, %v401
  %v420 = vsub.f32 %v357, %v404
  %v421 = vsub.f32 %v362, %v407
  %v422 = vmul.f32 %v408, 1.442695
  %v423 = vpow.pop %v422
  %v424 = vmul.f32 %v409, 1.442695
  %v425 = vpow.pop %v424
  %v426 = vmul.f32 %v410, 1.442695
  %v427 = vpow.pop %v426
  %v428 = vmul.f32 %v411, 1.442695
  %v429 = vpow.pop %v428
  %v430 = vmul.f32 %v412, 1.442695
  %v431 = vpow.pop %v430
  %v432 = vmul.f32 %v413, 1.442695
  %v433 = vpow.pop %v432
  %v434 = vmul.f32 %v414, 1.442695
  %v435 = vpow.pop %v434
  %v436 = vmul.f32 %v415, 1.442695
  %v437 = vpow.pop %v436
  %v438 = vmul.f32 %v416, 1.442695
  %v439 = vpow.pop %v438
  %v440 = vmul.f32 %v417, 1.442695
  %v441 = vpow.pop %v440
  %v442 = vmul.f32 %v418, 1.442695
  %v443 = vpow.pop %v442
  %v444 = vmul.f32 %v419, 1.442695
  %v445 = vpow.pop %v444
  %v446 = vmul.f32 %v420, 1.442695
  %v447 = vpow.pop %v446
  %v448 = vmul.f32 %v421, 1.442695
  %v449 = vpow.pop %v448
  %v450 = vsel %vm365, %v423, 0.0
  %451 = vadd.xlane.f32.xlu0 %v450
  %v452 = vpop.xlane.xlu0 %451
  %v453 = vsel %vm365, %v425, 0.0
  %454 = vadd.xlane.f32.xlu0 %v453
  %v455 = vpop.xlane.xlu0 %454
  %v456 = vsel %vm365, %v427, 0.0
  %457 = vadd.xlane.f32.xlu0 %v456
  %v458 = vpop.xlane.xlu0 %457
  %v459 = vsel %vm365, %v429, 0.0
  %460 = vadd.xlane.f32.xlu0 %v459
  %v461 = vpop.xlane.xlu0 %460
  %v462 = vsel %vm365, %v431, 0.0
  %463 = vadd.xlane.f32.xlu0 %v462
  %v464 = vpop.xlane.xlu0 %463
  %v465 = vsel %vm365, %v433, 0.0
  %466 = vadd.xlane.f32.xlu0 %v465
  %v467 = vpop.xlane.xlu0 %466
  %v468 = vsel %vm365, %v435, 0.0
  %469 = vadd.xlane.f32.xlu0 %v468
  %v470 = vpop.xlane.xlu0 %469
  %v471 = vsel %vm365, %v437, 0.0
  %472 = vadd.xlane.f32.xlu0 %v471
  %v473 = vpop.xlane.xlu0 %472
  %v474 = vsel %vm365, %v439, 0.0
  %475 = vadd.xlane.f32.xlu0 %v474
  %v476 = vpop.xlane.xlu0 %475
  %v477 = vsel %vm365, %v441, 0.0
  %478 = vadd.xlane.f32.xlu0 %v477
  %v479 = vpop.xlane.xlu0 %478
  %v480 = vsel %vm365, %v443, 0.0
  %481 = vadd.xlane.f32.xlu0 %v480
  %v482 = vpop.xlane.xlu0 %481
  %v483 = vsel %vm365, %v445, 0.0
  %484 = vadd.xlane.f32.xlu0 %v483
  %v485 = vpop.xlane.xlu0 %484
  %v486 = vsel %vm365, %v447, 0.0
  %487 = vadd.xlane.f32.xlu0 %v486
  %v488 = vpop.xlane.xlu0 %487
  %v489 = vsel %vm365, %v449, 0.0
  %490 = vadd.xlane.f32.xlu0 %v489
  %v491 = vpop.xlane.xlu0 %490
  %v493 = vsel %vm365, %v423, 0
  %v496 = vsel %vm365, %v425, 0
  %v499 = vsel %vm365, %v427, 0
  %v502 = vsel %vm365, %v429, 0
  %v505 = vsel %vm365, %v431, 0
  %v508 = vsel %vm365, %v433, 0
  %v511 = vsel %vm365, %v435, 0
  %513 = vmatprep.subr.mxu0 0.0
  %514 = vmatpush1.msra.mxu0 0.0
  %515 = vmatprep.subr.mxu0 0.0
  %516 = vmatpush1.msra.mxu0 0.0
  %517 = vmatprep.subr.mxu0 0.0
  %518 = vmatpush1.msra.mxu0 0.0
  %519 = vmatprep.subr.mxu0 0.0
  %520 = vmatpush1.msra.mxu0 0.0
  %521 = vmatprep.subr.mxu0 0.0
  %522 = vmatpush1.msra.mxu0 0.0
  %523 = vmatprep.subr.mxu0 0.0
  %524 = vmatpush1.msra.mxu0 0.0
  %525 = vmatprep.subr.mxu0 0.0
  %526 = vmatpush1.msra.mxu0 0.0
  %527 = vmatprep.subr.mxu0 0.0
  %528 = vmatpush1.msra.mxu0 0.0
  %529 = vmatprep.subr.mxu0 0.0
  %530 = vmatpush1.msra.mxu0 0.0
  %531 = vmatprep.subr.mxu0 0.0
  %532 = vmatpush1.msra.mxu0 %v65
  %533 = vmatprep.subr.mxu0 0.0
  %534 = vmatpush1.msra.mxu0 %v64
  %535 = vmatprep.subr.mxu0 0.0
  %536 = vmatpush1.msra.mxu0 %v63
  %537 = vmatprep.subr.mxu0 0.0
  %538 = vmatpush1.msra.mxu0 %v62
  %539 = vmatprep.subr.mxu0 0.0
  %540 = vmatpush1.msra.mxu0 %v61
  %541 = vmatprep.subr.mxu0 0.0
  %542 = vmatpush1.msra.mxu0 %v60
  %543 = vmatprep.subr.mxu0 0.0
  %544 = vmatpush1.msra.mxu0 %v59
  %545 = vmatprep.subr.mxu0 0.0
  %546 = vmatpush2.msra.mxu0 0.0
  %547 = vmatprep.subr.mxu0 0.0
  %548 = vmatpush2.msra.mxu0 0.0
  %549 = vmatprep.subr.mxu0 0.0
  %550 = vmatpush2.msra.mxu0 0.0
  %551 = vmatprep.subr.mxu0 0.0
  %552 = vmatpush2.msra.mxu0 0.0
  %553 = vmatprep.subr.mxu0 0.0
  %554 = vmatpush2.msra.mxu0 0.0
  %555 = vmatprep.subr.mxu0 0.0
  %556 = vmatpush2.msra.mxu0 0.0
  %557 = vmatprep.subr.mxu0 0.0
  %558 = vmatpush2.msra.mxu0 0.0
  %559 = vmatprep.subr.mxu0 0.0
  %560 = vmatpush2.msra.mxu0 0.0
  %561 = vmatprep.subr.mxu0 0.0
  %562 = vmatpush2.msra.mxu0 0.0
  %563 = vmatprep.subr.mxu0 0.0
  %564 = vmatpush2.msra.mxu0 0.0
  %565 = vmatprep.subr.mxu0 0.0
  %566 = vmatpush2.msra.mxu0 0.0
  %567 = vmatprep.subr.mxu0 0.0
  %568 = vmatpush2.msra.mxu0 0.0
  %569 = vmatprep.subr.mxu0 0.0
  %570 = vmatpush2.msra.mxu0 0.0
  %571 = vmatprep.subr.mxu0 0.0
  %572 = vmatpush2.msra.mxu0 0.0
  %573 = vmatprep.subr.mxu0 0.0
  %574 = vmatpush2.msra.mxu0 0.0
  %575 = vmatprep.subr.mxu0 0.0
  %576 = vmatpush2.msra.mxu0 0.0
  %577 = vmatprep.mubr.f32.mxu0 0.0
  %578 = vmatmul.mubr.f32.gmra.mxu0 %v493
  %v579 = vpop.f32.mrf.mxu0
  %v580 = vadd.f32 0.0, %v579
  %v581 = vpop.f32.mrf.mxu0
  %582 = vmatprep.mubr.f32.mxu0 0.0
  %583 = vmatmul.mubr.f32.gmra.mxu0 %v496
  %v584 = vpop.f32.mrf.mxu0
  %v585 = vadd.f32 0.0, %v584
  %v586 = vpop.f32.mrf.mxu0
  %587 = vmatprep.mubr.f32.mxu0 0.0
  %588 = vmatmul.mubr.f32.gmra.mxu0 %v499
  %v589 = vpop.f32.mrf.mxu0
  %v590 = vadd.f32 0.0, %v589
  %v591 = vpop.f32.mrf.mxu0
  %592 = vmatprep.mubr.f32.mxu0 0.0
  %593 = vmatmul.mubr.f32.gmra.mxu0 %v502
  %v594 = vpop.f32.mrf.mxu0
  %v595 = vadd.f32 0.0, %v594
  %v596 = vpop.f32.mrf.mxu0
  %597 = vmatprep.mubr.f32.mxu0 0.0
  %598 = vmatmul.mubr.f32.gmra.mxu0 %v505
  %v599 = vpop.f32.mrf.mxu0
  %v600 = vadd.f32 0.0, %v599
  %v601 = vpop.f32.mrf.mxu0
  %602 = vmatprep.mubr.f32.mxu0 0.0
  %603 = vmatmul.mubr.f32.gmra.mxu0 %v508
  %v604 = vpop.f32.mrf.mxu0
  %v605 = vadd.f32 0.0, %v604
  %v606 = vpop.f32.mrf.mxu0
  %607 = vmatprep.mubr.f32.mxu0 0.0
  %608 = vmatmul.mubr.f32.gmra.mxu0 %v511
  %v609 = vpop.f32.mrf.mxu0
  %v610 = vadd.f32 0.0, %v609
  %v611 = vpop.f32.mrf.mxu0
  %612 = vdwg.mxu0
  %v614 = vsel %vm365, %v437, 0
  %v617 = vsel %vm365, %v439, 0
  %v620 = vsel %vm365, %v441, 0
  %v623 = vsel %vm365, %v443, 0
  %v626 = vsel %vm365, %v445, 0
  %v629 = vsel %vm365, %v447, 0
  %v632 = vsel %vm365, %v449, 0
  %634 = vmatprep.subr.mxu0 0.0
  %635 = vmatpush1.msra.mxu0 0.0
  %636 = vmatprep.subr.mxu0 0.0
  %637 = vmatpush1.msra.mxu0 0.0
  %638 = vmatprep.subr.mxu0 0.0
  %639 = vmatpush1.msra.mxu0 0.0
  %640 = vmatprep.subr.mxu0 0.0
  %641 = vmatpush1.msra.mxu0 0.0
  %642 = vmatprep.subr.mxu0 0.0
  %643 = vmatpush1.msra.mxu0 0.0
  %644 = vmatprep.subr.mxu0 0.0
  %645 = vmatpush1.msra.mxu0 0.0
  %646 = vmatprep.subr.mxu0 0.0
  %647 = vmatpush1.msra.mxu0 0.0
  %648 = vmatprep.subr.mxu0 0.0
  %649 = vmatpush1.msra.mxu0 0.0
  %650 = vmatprep.subr.mxu0 0.0
  %651 = vmatpush1.msra.mxu0 0.0
  %652 = vmatprep.subr.mxu0 0.0
  %653 = vmatpush1.msra.mxu0 %v72
  %654 = vmatprep.subr.mxu0 0.0
  %655 = vmatpush1.msra.mxu0 %v71
  %656 = vmatprep.subr.mxu0 0.0
  %657 = vmatpush1.msra.mxu0 %v70
  %658 = vmatprep.subr.mxu0 0.0
  %659 = vmatpush1.msra.mxu0 %v69
  %660 = vmatprep.subr.mxu0 0.0
  %661 = vmatpush1.msra.mxu0 %v68
  %662 = vmatprep.subr.mxu0 0.0
  %663 = vmatpush1.msra.mxu0 %v67
  %664 = vmatprep.subr.mxu0 0.0
  %665 = vmatpush1.msra.mxu0 %v66
  %666 = vmatprep.subr.mxu0 0.0
  %667 = vmatpush2.msra.mxu0 0.0
  %668 = vmatprep.subr.mxu0 0.0
  %669 = vmatpush2.msra.mxu0 0.0
  %670 = vmatprep.subr.mxu0 0.0
  %671 = vmatpush2.msra.mxu0 0.0
  %672 = vmatprep.subr.mxu0 0.0
  %673 = vmatpush2.msra.mxu0 0.0
  %674 = vmatprep.subr.mxu0 0.0
  %675 = vmatpush2.msra.mxu0 0.0
  %676 = vmatprep.subr.mxu0 0.0
  %677 = vmatpush2.msra.mxu0 0.0
  %678 = vmatprep.subr.mxu0 0.0
  %679 = vmatpush2.msra.mxu0 0.0
  %680 = vmatprep.subr.mxu0 0.0
  %681 = vmatpush2.msra.mxu0 0.0
  %682 = vmatprep.subr.mxu0 0.0
  %683 = vmatpush2.msra.mxu0 0.0
  %684 = vmatprep.subr.mxu0 0.0
  %685 = vmatpush2.msra.mxu0 0.0
  %686 = vmatprep.subr.mxu0 0.0
  %687 = vmatpush2.msra.mxu0 0.0
  %688 = vmatprep.subr.mxu0 0.0
  %689 = vmatpush2.msra.mxu0 0.0
  %690 = vmatprep.subr.mxu0 0.0
  %691 = vmatpush2.msra.mxu0 0.0
  %692 = vmatprep.subr.mxu0 0.0
  %693 = vmatpush2.msra.mxu0 0.0
  %694 = vmatprep.subr.mxu0 0.0
  %695 = vmatpush2.msra.mxu0 0.0
  %696 = vmatprep.subr.mxu0 0.0
  %697 = vmatpush2.msra.mxu0 0.0
  %698 = vmatprep.mubr.f32.mxu0 0.0
  %699 = vmatmul.mubr.f32.gmra.mxu0 %v614
  %v700 = vpop.f32.mrf.mxu0
  %v701 = vadd.f32 0.0, %v700
  %v702 = vpop.f32.mrf.mxu0
  %703 = vmatprep.mubr.f32.mxu0 0.0
  %704 = vmatmul.mubr.f32.gmra.mxu0 %v617
  %v705 = vpop.f32.mrf.mxu0
  %v706 = vadd.f32 0.0, %v705
  %v707 = vpop.f32.mrf.mxu0
  %708 = vmatprep.mubr.f32.mxu0 0.0
  %709 = vmatmul.mubr.f32.gmra.mxu0 %v620
  %v710 = vpop.f32.mrf.mxu0
  %v711 = vadd.f32 0.0, %v710
  %v712 = vpop.f32.mrf.mxu0
  %713 = vmatprep.mubr.f32.mxu0 0.0
  %714 = vmatmul.mubr.f32.gmra.mxu0 %v623
  %v715 = vpop.f32.mrf.mxu0
  %v716 = vadd.f32 0.0, %v715
  %v717 = vpop.f32.mrf.mxu0
  %718 = vmatprep.mubr.f32.mxu0 0.0
  %719 = vmatmul.mubr.f32.gmra.mxu0 %v626
  %v720 = vpop.f32.mrf.mxu0
  %v721 = vadd.f32 0.0, %v720
  %v722 = vpop.f32.mrf.mxu0
  %723 = vmatprep.mubr.f32.mxu0 0.0
  %724 = vmatmul.mubr.f32.gmra.mxu0 %v629
  %v725 = vpop.f32.mrf.mxu0
  %v726 = vadd.f32 0.0, %v725
  %v727 = vpop.f32.mrf.mxu0
  %728 = vmatprep.mubr.f32.mxu0 0.0
  %729 = vmatmul.mubr.f32.gmra.mxu0 %v632
  %v730 = vpop.f32.mrf.mxu0
  %v731 = vadd.f32 0.0, %v730
  %v732 = vpop.f32.mrf.mxu0
  %733 = vdwg.mxu0
  %v734 = vrcp.pop %v452
  %v735 = vrcp.pop %v455
  %v736 = vrcp.pop %v458
  %v737 = vrcp.pop %v461
  %v738 = vrcp.pop %v464
  %v739 = vrcp.pop %v467
  %v740 = vrcp.pop %v470
  %v741 = vrcp.pop %v473
  %v742 = vrcp.pop %v476
  %v743 = vrcp.pop %v479
  %v744 = vrcp.pop %v482
  %v745 = vrcp.pop %v485
  %v746 = vrcp.pop %v488
  %v747 = vrcp.pop %v491
  %v748 = vmul.f32 %v580, %v734
  %v749 = vmul.f32 %v585, %v735
  %v750 = vmul.f32 %v590, %v736
  %v751 = vmul.f32 %v595, %v737
  %v752 = vmul.f32 %v600, %v738
  %v753 = vmul.f32 %v605, %v739
  %v754 = vmul.f32 %v610, %v740
  %v755 = vmul.f32 %v701, %v741
  %v756 = vmul.f32 %v706, %v742
  %v757 = vmul.f32 %v711, %v743
  %v758 = vmul.f32 %v716, %v744
  %v759 = vmul.f32 %v721, %v745
  %v760 = vmul.f32 %v726, %v746
  %v761 = vmul.f32 %v731, %v747
  %762 = vst.msk [vmem:[%s4] sm:$0xff] %vm80, %v748
  %763 = vst.msk [vmem:[%s4 + $0x8] sm:$0xff] %vm80, %v749
  %764 = vst.msk [vmem:[%s4 + $0x10] sm:$0xff] %vm80, %v750
  %765 = vst.msk [vmem:[%s4 + $0x18] sm:$0xff] %vm80, %v751
  %766 = vst.msk [vmem:[%s4 + $0x20] sm:$0xff] %vm80, %v752
  %767 = vst.msk [vmem:[%s4 + $0x28] sm:$0xff] %vm80, %v753
  %768 = vst.msk [vmem:[%s4 + $0x30] sm:$0xff] %vm80, %v754
  %769 = vst.msk [vmem:[%s4 + $0x38] sm:$0xff] %vm80, %v755
  %770 = vst.msk [vmem:[%s4 + $0x40] sm:$0xff] %vm80, %v756
  %771 = vst.msk [vmem:[%s4 + $0x48] sm:$0xff] %vm80, %v757
  %772 = vst.msk [vmem:[%s4 + $0x50] sm:$0xff] %vm80, %v758
  %773 = vst.msk [vmem:[%s4 + $0x58] sm:$0xff] %vm80, %v759
  %774 = vst.msk [vmem:[%s4 + $0x60] sm:$0xff] %vm80, %v760
  %775 = vst.msk [vmem:[%s4 + $0x68] sm:$0xff] %vm80, %v761
  // Predicated region
  $region18: #{tpu_custom_call.1} parent=0 // pred_check
    _
  $region19: #{tpu_custom_call.1} parent=0 // pred_check_branch
    %777 = sbr.rel (0) target = $region21
  $region20: #{tpu_custom_call.1} parent=0 // pred_region
    _
  $region21: #{tpu_custom_call.1} parent=0 // pred_fallthru
    _
  // Predicated region
  $region22: #{tpu_custom_call.1} parent=0 // pred_check
    _
  $region23: #{tpu_custom_call.1} parent=0 // pred_check_branch
    %779 = sbr.rel (0) target = $region25
  $region24: #{tpu_custom_call.1} parent=0 // pred_region
    _
  $region25: #{tpu_custom_call.1} parent=0 // pred_fallthru
    _

</llo_original>
